<compile_context>
chip_gen: v7x
topology: tpu7x:2x2x1
jax: 0.10.0
libtpu: 0.0.40
codegen_flags: <defaults>
</compile_context>

<pallas_src>
import functools

import jax
import jax.numpy as jnp
from jax import lax
from jax.experimental import pallas as pl
from jax.experimental.pallas import tpu as pltpu

_EPS = 1e-5
_BLOCK_BUDGET_BYTES = 4 * 1024 * 1024      # per-block cap for the streaming passes
_VMEM_LIMIT_BYTES = 48 * 1024 * 1024       # scoped VMEM; fits v7x (64 MiB physical)
_FUSED_VMEM_BUDGET = 24 * 1024 * 1024      # threshold for the single-pass path


def _round_up(v, m):
    return ((v + m - 1) // m) * m


def _sublane_req(itemsize):
    # minimal second-minor tiling granularity per dtype width
    return {4: 8, 2: 16, 1: 32}.get(int(itemsize), 8)


def _choose_tiles(n, c, hw, itemsize, budget):
    """Pick (tile_n, tile_c, tile_hw) for a (N, C, HW) view.

    Channels (and N) are tiled first; HW is only tiled if a minimal channel tile
    with full HW still exceeds the budget.  All tiles are layout-legal:
    tile_c is a multiple of the sublane granularity (or == C), tile_hw is a
    multiple of 128 (or == HW).  Byte accounting includes lane/sublane padding.
    """
    creq = _sublane_req(itemsize)

    c_cands = sorted({c} | {d for d in range(creq, c, creq) if c % d == 0},
                     reverse=True)
    hw_cands = sorted({hw} | {d for d in range(128, hw, 128) if hw % d == 0},
                      reverse=True)
    n_cands = sorted({d for d in range(1, n + 1) if n % d == 0}, reverse=True)

    def blk_bytes(tn, tc, thw):
        return tn * _round_up(tc, creq) * _round_up(thw, 128) * itemsize

    for thw in hw_cands:                      # prefer full HW (contiguous DMA)
        for tc in c_cands:                    # then the largest channel tile
            if blk_bytes(1, tc, thw) > budget:
                continue
            for tn in n_cands:                # then grow N
                if blk_bytes(tn, tc, thw) <= budget:
                    return tn, tc, thw
    # Nothing meets the budget even at the minimum legal tile (rare: huge HW with
    # no multiple-of-128 divisor).  Take the smallest legal block and rely on the
    # raised vmem_limit_bytes headroom.
    return 1, min(c_cands), min(hw_cands)


def _lane_group(c, hw):
    """Smallest divisor g of C with g*HW >= 128 (lane-dense stores in pass 2)."""
    if hw >= 128:
        return 1
    for g in range(2, c + 1):
        if c % g == 0 and g * hw >= 128:
            return g
    return 1


# --------------------------------------------------------------------------- #
# Kernels
# --------------------------------------------------------------------------- #
def _fused_kernel(x_ref, gamma_ref, beta_ref, o_ref, *, apply_relu, inv_count, eps):
    # Whole tensor resident: read once, stats + normalize + ReLU in one pass.
    x = x_ref[...].astype(jnp.float32)                                   # (N, C, HW)
    mean = (jnp.sum(jnp.sum(x, axis=0), axis=-1, keepdims=True) * inv_count)[None]
    xc = x - mean                                                        # centered
    var = (jnp.sum(jnp.sum(xc * xc, axis=0), axis=-1, keepdims=True) * inv_count)[None]
    inv_std = lax.rsqrt(var + eps)
    scale = gamma_ref[...] * inv_std                                     # (1, C, 1)
    y = xc * scale + beta_ref[...]
    if apply_relu:
        y = jnp.maximum(y, 0.0)
    o_ref[...] = y.astype(o_ref.dtype)


def _stats_kernel(x_ref, sum_ref, m2_ref, *, inv_block_count):
    # x_ref: (tile_n, tile_c, tile_hw).  Emit per-channel block sum and
    # block-centered M2 (numerically stable; merged with Chan's formula outside).
    x = x_ref[...].astype(jnp.float32)
    xs = jnp.sum(x, axis=0)                              # VALU adds over tile_n
    s = jnp.sum(xs, axis=-1, keepdims=True)              # (tile_c, 1) lane reduce
    mean_b = s * inv_block_count
    xc = x - mean_b[None]
    m2 = jnp.sum(jnp.sum(xc * xc, axis=0), axis=-1, keepdims=True)
    sum_ref[0, 0, :, :] = s
    m2_ref[0, 0, :, :] = m2


def _apply_kernel(x_ref, scale_ref, shift_ref, o_ref, *, apply_relu):
    # x_ref: (tile_n, tile_c, tile_hw); scale/shift broadcast over rows (and lanes
    # when ungrouped).
    x = x_ref[...].astype(jnp.float32)
    y = x * scale_ref[...] + shift_ref[...]
    if apply_relu:
        y = jnp.maximum(y, 0.0)
    o_ref[...] = y.astype(o_ref.dtype)


# --------------------------------------------------------------------------- #
# Wrapper
# --------------------------------------------------------------------------- #
def bn_relu(x_nchw, gamma, beta, activation: bool = True, *, _force_streaming: bool = False):
    """x_nchw: (N, C, H, W). gamma, beta: (C,). Returns (N, C, H, W)."""
    n, c, h, w = x_nchw.shape
    hw = h * w
    dtype = x_nchw.dtype
    itemsize = int(jnp.dtype(dtype).itemsize)
    creq = _sublane_req(itemsize)
    x3d = x_nchw.reshape(n, c, hw)  # free view, stays in NCHW element order

    # ------------------- fused single-pass path (VMEM-resident) ----------------
    padded_elems = n * _round_up(c, creq) * _round_up(hw, 128)
    fused_vmem_est = padded_elems * (2 * itemsize + 3 * 4)   # in + out + f32 temps
    if (not _force_streaming) and fused_vmem_est <= _FUSED_VMEM_BUDGET:
        gamma3 = gamma.astype(jnp.float32).reshape(1, c, 1)
        beta3 = beta.astype(jnp.float32).reshape(1, c, 1)
        kernel = functools.partial(_fused_kernel, apply_relu=activation,
                                   inv_count=1.0 / float(n * hw), eps=_EPS)
        out3d = pl.pallas_call(
            kernel,
            out_shape=jax.ShapeDtypeStruct((n, c, hw), dtype),
            compiler_params=pltpu.CompilerParams(vmem_limit_bytes=_VMEM_LIMIT_BYTES),
            cost_estimate=pl.CostEstimate(flops=8 * n * c * hw, transcendentals=c,
                                          bytes_accessed=2 * n * c * hw * itemsize),
        )(x3d, gamma3, beta3)
        return out3d.reshape(n, c, h, w)

    # ---------------- pass 1: per-block per-channel (sum, M2) partials ----------
    tn_s, tc_s, thw_s = _choose_tiles(n, c, hw, itemsize, _BLOCK_BUDGET_BYTES)
    gn, gc, ghw = n // tn_s, c // tc_s, hw // thw_s
    block_count = tn_s * thw_s

    stats_kernel = functools.partial(_stats_kernel,
                                     inv_block_count=1.0 / float(block_count))
    part_sum, part_m2 = pl.pallas_call(
        stats_kernel,
        out_shape=(jax.ShapeDtypeStruct((gn, ghw, c, 1), jnp.float32),
                   jax.ShapeDtypeStruct((gn, ghw, c, 1), jnp.float32)),
        grid=(gn, gc, ghw),
        in_specs=[pl.BlockSpec((tn_s, tc_s, thw_s), lambda i, jc, jhw: (i, jc, jhw))],
        out_specs=(pl.BlockSpec((1, 1, tc_s, 1), lambda i, jc, jhw: (i, jhw, jc, 0)),
                   pl.BlockSpec((1, 1, tc_s, 1), lambda i, jc, jhw: (i, jhw, jc, 0))),
        compiler_params=pltpu.CompilerParams(
            dimension_semantics=("parallel", "parallel", "parallel"),
            vmem_limit_bytes=_VMEM_LIMIT_BYTES),
        cost_estimate=pl.CostEstimate(flops=5 * n * c * hw, transcendentals=0,
                                      bytes_accessed=n * c * hw * itemsize
                                      + 2 * gn * ghw * c * 4),
    )(x3d)

    # -------- tiny O(grid*C) epilogue: Chan merge of partials, hoist affine -----
    count = float(n * hw)
    bsum = part_sum[..., 0]                                   # (gn, ghw, c)
    bm2 = part_m2[..., 0]
    total_sum = jnp.sum(bsum, axis=(0, 1))                    # (c,)
    mean = total_sum / count
    block_mean = bsum / float(block_count)
    m2 = jnp.sum(bm2, axis=(0, 1)) + float(block_count) * jnp.sum(
        (block_mean - mean[None, None, :]) ** 2, axis=(0, 1))
    var = jnp.maximum(m2 / count, 0.0)                        # biased var (PyTorch fwd)
    inv_std = lax.rsqrt(var + _EPS)
    scale = gamma.astype(jnp.float32) * inv_std               # (c,)
    shift = beta.astype(jnp.float32) - mean * scale

    # ---------------- pass 2: streaming normalize (+ ReLU) ----------------------
    g = _lane_group(c, hw)                 # lane-dense writes for small H*W layers
    c_a, hw_a = c // g, g * hw
    x_a = x3d.reshape(n, c_a, hw_a)        # free reshape (channels contiguous)

    if g == 1:
        scale_a = scale.reshape(1, c, 1)
        shift_a = shift.reshape(1, c, 1)
    else:
        scale_a = jnp.repeat(scale.reshape(c_a, g), hw, axis=1).reshape(1, c_a, hw_a)
        shift_a = jnp.repeat(shift.reshape(c_a, g), hw, axis=1).reshape(1, c_a, hw_a)

    tn_a, tc_a, thw_a = _choose_tiles(n, c_a, hw_a, itemsize, _BLOCK_BUDGET_BYTES)
    gn_a, gc_a, ghw_a = n // tn_a, c_a // tc_a, hw_a // thw_a

    if g == 1:
        ss_spec = pl.BlockSpec((1, tc_a, 1), lambda i, jc, jhw: (0, jc, 0))
    else:
        ss_spec = pl.BlockSpec((1, tc_a, thw_a), lambda i, jc, jhw: (0, jc, jhw))

    apply_kernel = functools.partial(_apply_kernel, apply_relu=activation)
    out_a = pl.pallas_call(
        apply_kernel,
        out_shape=jax.ShapeDtypeStruct((n, c_a, hw_a), dtype),
        grid=(gn_a, gc_a, ghw_a),
        in_specs=[pl.BlockSpec((tn_a, tc_a, thw_a), lambda i, jc, jhw: (i, jc, jhw)),
                  ss_spec, ss_spec],
        out_specs=pl.BlockSpec((tn_a, tc_a, thw_a), lambda i, jc, jhw: (i, jc, jhw)),
        compiler_params=pltpu.CompilerParams(
            dimension_semantics=("parallel", "parallel", "parallel"),
            vmem_limit_bytes=_VMEM_LIMIT_BYTES),
        cost_estimate=pl.CostEstimate(flops=3 * n * c * hw, transcendentals=0,
                                      bytes_accessed=2 * n * c * hw * itemsize),
    )(x_a, scale_a, shift_a)

    return out_a.reshape(n, c, h, w)


# --------------------------------------------------------------------------- #
# Reference & test
# --------------------------------------------------------------------------- #
def _bn_relu_ref(x_nchw, gamma, beta, activation=True):
    x = x_nchw.astype(jnp.float32)
    mean = jnp.mean(x, axis=(0, 2, 3), keepdims=True)
    var = jnp.mean((x - mean) ** 2, axis=(0, 2, 3), keepdims=True)
    y = (x - mean) * lax.rsqrt(var + _EPS)
    y = y * gamma.reshape(1, -1, 1, 1).astype(jnp.float32) \
        + beta.reshape(1, -1, 1, 1).astype(jnp.float32)
    if activation:
        y = jnp.maximum(y, 0.0)
    return y.astype(x_nchw.dtype)


if __name__ == "__main__":
    key = jax.random.PRNGKey(0)
    k0, k1 = jax.random.split(key)

    fn = jax.jit(bn_relu, static_argnames=("activation", "_force_streaming"))

    # Primary example (PyTorch BatchNorm2d default affine init: weight=1, bias=0).
    N, C, H, W = 2, 4, 16, 16
    x = jax.random.normal(k0, (N, C, H, W), dtype=jnp.float32)
    gamma = jnp.ones((C,), dtype=jnp.float32)
    beta = jnp.zeros((C,), dtype=jnp.float32)

    out = jax.block_until_ready(fn(x, gamma, beta, activation=True))
    ref = _bn_relu_ref(x, gamma, beta, True)
    assert out.shape == (N, C, H, W)
    assert jnp.max(jnp.abs(out - ref)) < 1e-4, "fused path mismatch vs reference"

    # Exercise the streaming two-pass path on the same small input.
    out2 = jax.block_until_ready(
        fn(x, gamma, beta, activation=True, _force_streaming=True))
    assert jnp.max(jnp.abs(out2 - ref)) < 1e-4, "streaming path mismatch vs reference"

    # Exercise the small-HW lane-grouped apply path (H*W = 49 < 128) with affine.
    N3, C3, H3, W3 = 2, 8, 7, 7
    x3 = jax.random.normal(k1, (N3, C3, H3, W3), dtype=jnp.float32)
    gamma3 = jnp.linspace(0.5, 1.5, C3, dtype=jnp.float32)
    beta3 = jnp.linspace(-0.2, 0.2, C3, dtype=jnp.float32)
    out3 = jax.block_until_ready(
        fn(x3, gamma3, beta3, activation=True, _force_streaming=True))
    ref3 = _bn_relu_ref(x3, gamma3, beta3, True)
    assert jnp.max(jnp.abs(out3 - ref3)) < 1e-4, "grouped path mismatch vs reference"

    print("KERNEL_OK")
</pallas_src>

<mosaic_0001>
module attributes {stable_mosaic.version = 11 : i64} {
  func.func @_fused_kernel(%arg0: memref<2x4x256xf32, #tpu.memory_space<vmem>>, %arg1: memref<1x4x1xf32, #tpu.memory_space<vmem>>, %arg2: memref<1x4x1xf32, #tpu.memory_space<vmem>>, %arg3: memref<2x4x256xf32, #tpu.memory_space<vmem>>) attributes {dimension_semantics = [], scalar_prefetch = 0 : i64, scratch_operands = 0 : i64, tpu.core_type = #tpu.core_type<tc>} {
    %c0 = arith.constant 0 : index
    %c0_0 = arith.constant 0 : index
    %c0_1 = arith.constant 0 : index
    %0 = vector.load %arg0[%c0, %c0_0, %c0_1] : memref<2x4x256xf32, #tpu.memory_space<vmem>>, vector<2x4x256xf32>
    %cst = arith.constant dense<0.000000e+00> : vector<4x256xf32>
    %1 = vector.multi_reduction <add>, %0, %cst [0] : vector<2x4x256xf32> to vector<4x256xf32>
    %cst_2 = arith.constant dense<0.000000e+00> : vector<4xf32>
    %2 = vector.multi_reduction <add>, %1, %cst_2 [1] : vector<4x256xf32> to vector<4xf32>
    %3 = vector.shape_cast %2 : vector<4xf32> to vector<4x1xf32>
    %cst_3 = arith.constant 0.001953125 : f32
    %4 = vector.broadcast %cst_3 : f32 to vector<4x1xf32>
    %5 = arith.mulf %3, %4 : vector<4x1xf32>
    %6 = vector.shape_cast %5 : vector<4x1xf32> to vector<1x4x1xf32>
    %7 = vector.broadcast %6 : vector<1x4x1xf32> to vector<2x4x256xf32>
    %8 = arith.subf %0, %7 : vector<2x4x256xf32>
    %9 = arith.mulf %8, %8 : vector<2x4x256xf32>
    %cst_4 = arith.constant dense<0.000000e+00> : vector<4x256xf32>
    %10 = vector.multi_reduction <add>, %9, %cst_4 [0] : vector<2x4x256xf32> to vector<4x256xf32>
    %cst_5 = arith.constant dense<0.000000e+00> : vector<4xf32>
    %11 = vector.multi_reduction <add>, %10, %cst_5 [1] : vector<4x256xf32> to vector<4xf32>
    %12 = vector.shape_cast %11 : vector<4xf32> to vector<4x1xf32>
    %cst_6 = arith.constant 0.001953125 : f32
    %13 = vector.broadcast %cst_6 : f32 to vector<4x1xf32>
    %14 = arith.mulf %12, %13 : vector<4x1xf32>
    %15 = vector.shape_cast %14 : vector<4x1xf32> to vector<1x4x1xf32>
    %cst_7 = arith.constant 9.99999974E-6 : f32
    %16 = vector.broadcast %cst_7 : f32 to vector<1x4x1xf32>
    %17 = arith.addf %15, %16 : vector<1x4x1xf32>
    %18 = math.rsqrt %17 : vector<1x4x1xf32>
    %c0_8 = arith.constant 0 : index
    %c0_9 = arith.constant 0 : index
    %c0_10 = arith.constant 0 : index
    %19 = vector.load %arg1[%c0_8, %c0_9, %c0_10] : memref<1x4x1xf32, #tpu.memory_space<vmem>>, vector<1x4x1xf32>
    %20 = arith.mulf %19, %18 : vector<1x4x1xf32>
    %21 = vector.broadcast %20 : vector<1x4x1xf32> to vector<2x4x256xf32>
    %22 = arith.mulf %8, %21 : vector<2x4x256xf32>
    %c0_11 = arith.constant 0 : index
    %c0_12 = arith.constant 0 : index
    %c0_13 = arith.constant 0 : index
    %23 = vector.load %arg2[%c0_11, %c0_12, %c0_13] : memref<1x4x1xf32, #tpu.memory_space<vmem>>, vector<1x4x1xf32>
    %24 = vector.broadcast %23 : vector<1x4x1xf32> to vector<2x4x256xf32>
    %25 = arith.addf %22, %24 : vector<2x4x256xf32>
    %cst_14 = arith.constant 0.000000e+00 : f32
    %26 = vector.broadcast %cst_14 : f32 to vector<2x4x256xf32>
    %27 = arith.maximumf %25, %26 : vector<2x4x256xf32>
    %c0_15 = arith.constant 0 : index
    %c0_16 = arith.constant 0 : index
    %c0_17 = arith.constant 0 : index
    %28 = vector.load %arg3[%c0_15, %c0_16, %c0_17] : memref<2x4x256xf32, #tpu.memory_space<vmem>>, vector<2x4x256xf32>
    tpu.vector_store %arg3[%c0_15, %c0_16, %c0_17], %27 {strides = array<i32>} : memref<2x4x256xf32, #tpu.memory_space<vmem>>, vector<2x4x256xf32>,
    return
  }
}

</mosaic_0001>

<llo_original>
// kernel: bn_relu.1
$region0: #{bn_relu.1}
  #allocation0 [shape = 'u32[]', space=smem, size = 0x4, offset = 0x4, fixed_abs, tag = 'smem constant byte address 0x4 - core index']
  #allocation1 [shape = 'u32[144,128]{1,0:T(1,128)}', space=vmem, size = 0x12000, scoped, tag = 'internal scratch']
  %s0 = inlined_call_operand.vmem [shape: f32[2,4,256], index: 0, kind: input, shape index: {}]
  %s1 = inlined_call_operand.vmem [shape: f32[1,4,1], index: 1, kind: input, shape index: {}]
  %s2 = inlined_call_operand.vmem [shape: f32[1,4,1], index: 2, kind: input, shape index: {}]
  %s3 = inlined_call_operand.vmem [shape: f32[2,4,256], index: 3, kind: output, shape index: {}]
  %s4 = sld [smem:[#allocation0]]
  $region22: #{bn_relu.1} parent=0
    _
  %s6 = ssub.s32 1, %s4
  %s7 = scalar_select 0, %s6, %s4
  // Predicated region
  $region2: #{bn_relu.1} parent=0 // pred_check
    _
  $region3: #{bn_relu.1} parent=0 // pred_check_branch
    %9 = sbr.rel (0) target = $region5
  $region4: #{bn_relu.1} parent=0 // pred_region
    _
  $region5: #{bn_relu.1} parent=0 // pred_fallthru
    _
  // Predicated region
  $region6: #{bn_relu.1} parent=0 // pred_check
    _
  $region7: #{bn_relu.1} parent=0 // pred_check_branch
    %11 = sbr.rel (0) target = $region9
  $region8: #{bn_relu.1} parent=0 // pred_region
    _
  $region9: #{bn_relu.1} parent=0 // pred_fallthru
    _
  // Predicated region
  $region10: #{bn_relu.1} parent=0 // pred_check
    _
  $region11: #{bn_relu.1} parent=0 // pred_check_branch
    %13 = sbr.rel (0) target = $region13
  $region12: #{bn_relu.1} parent=0 // pred_region
    _
  $region13: #{bn_relu.1} parent=0 // pred_fallthru
    _
  %v14 = vld [vmem:[%s0] sm:$0xff]
  %v15 = vld [vmem:[%s0 + $0x8] sm:$0xff]
  %v18 = vcombine.high %v14, %v14
  %v19 = vcombine.high %v15, %v15
  %vm22 = vcmask 1043456
  %v23 = vsel %vm22, %v14, 0.0
  %v24 = vsel %vm22, %v15, 0.0
  %v25 = vadd.f32 %v23, %v24
  %v26 = vsel %vm22, %v18, 0.0
  %v27 = vsel %vm22, %v19, 0.0
  %v28 = vadd.f32 %v26, %v27
  %v29 = vsel %vm22, %v25, 0.0
  %v30 = vsel %vm22, %v28, 0.0
  %v31 = vadd.f32 %v29, %v30
  %32 = vadd.xlane.f32.xlu0 %v31
  %v33 = vpop.xlane.xlu0 %32
  %v34 = vmul.f32 %v33, 0.001953125
  %v37 = vunpack.c.l.s4 839922192
  %v38 = vunpack.c.0.s8 %v37
  %v39 = vlaneseq
  %v40 = vshrl.u32 %v39, 7
  %v41 = vsub.s32 %v38, %v40
  %v42 = vrot.slane %v34, %v41
  %v44 = vsub.f32 %v14, %v42
  %v45 = vsub.f32 %v15, %v42
  %v46 = vmul.f32 %v44, %v44
  %v47 = vmul.f32 %v45, %v45
  %v50 = vcombine.high %v46, %v46
  %v51 = vcombine.high %v47, %v47
  %v54 = vsel %vm22, %v46, 0.0
  %v55 = vsel %vm22, %v47, 0.0
  %v56 = vadd.f32 %v54, %v55
  %v57 = vsel %vm22, %v50, 0.0
  %v58 = vsel %vm22, %v51, 0.0
  %v59 = vadd.f32 %v57, %v58
  %v60 = vsel %vm22, %v56, 0.0
  %v61 = vsel %vm22, %v59, 0.0
  %v62 = vadd.f32 %v60, %v61
  %63 = vadd.xlane.f32.xlu0 %v62
  %v64 = vpop.xlane.xlu0 %63
  %v65 = vmul.f32 %v64, 0.001953125
  %v66 = vadd.f32 %v65, 1e-05
  %v67 = vrsqrt.pop %v66
  %v68 = vld [vmem:[%s1] sm:$0xf]
  %v69 = vmul.f32 %v68, %v67
  %71 = vset.pattern.permute.xlu0 0
  %72 = vperm.xlu0 %71, %v69
  %v73 = vpop.permute.xlu0 %72
  %v75 = vunpack.c.l.s4 839922192
  %v76 = vunpack.c.0.s8 %v75
  %v77 = vlaneseq
  %v78 = vshrl.u32 %v77, 7
  %v79 = vsub.s32 %v76, %v78
  %v80 = vrot.slane %v73, %v79
  %v82 = vmul.f32 %v44, %v80
  %v83 = vmul.f32 %v45, %v80
  %v84 = vld [vmem:[%s2] sm:$0xf]
  %86 = vset.pattern.permute.xlu0 0
  %87 = vperm.xlu0 %86, %v84
  %v88 = vpop.permute.xlu0 %87
  %v90 = vunpack.c.l.s4 839922192
  %v91 = vunpack.c.0.s8 %v90
  %v92 = vlaneseq
  %v93 = vshrl.u32 %v92, 7
  %v94 = vsub.s32 %v91, %v93
  %v95 = vrot.slane %v88, %v94
  %v97 = vadd.f32 %v82, %v95
  %v98 = vadd.f32 %v83, %v95
  %v99 = vmax.f32 %v97, 0.0
  %v100 = vmax.f32 %v98, 0.0
  %101 = vst [vmem:[%s3] sm:$0xff] %v99
  %102 = vst [vmem:[%s3 + $0x8] sm:$0xff] %v100
  // Predicated region
  $region14: #{bn_relu.1} parent=0 // pred_check
    _
  $region15: #{bn_relu.1} parent=0 // pred_check_branch
    %104 = sbr.rel (0) target = $region17
  $region16: #{bn_relu.1} parent=0 // pred_region
    _
  $region17: #{bn_relu.1} parent=0 // pred_fallthru
    _
  // Predicated region
  $region18: #{bn_relu.1} parent=0 // pred_check
    _
  $region19: #{bn_relu.1} parent=0 // pred_check_branch
    %106 = sbr.rel (0) target = $region21
  $region20: #{bn_relu.1} parent=0 // pred_region
    _
  $region21: #{bn_relu.1} parent=0 // pred_fallthru
    _

</llo_original>
